<compile_context>
chip_gen: v6e
topology: v6e:2x2x1
jax: 0.10.0
libtpu: 0.0.40
codegen_flags: <defaults>
</compile_context>

<pallas_src>
import functools

import jax
import jax.numpy as jnp
from jax.experimental import pallas as pl
from jax.experimental.pallas import tpu as pltpu

_LANES = 128


def _make_tanhlu_kernel(eps: float, inv_eps: float):
    def kernel(x_ref, o_ref):
        x = x_ref[...].astype(jnp.float32)
        # eps * (tanh((x - eps) / eps) + 1)  ==  eps * tanh((x - eps) * inv_eps) + eps
        shifted = eps * jnp.tanh((x - eps) * inv_eps) + eps
        o_ref[...] = jnp.where(x >= eps, x, shifted).astype(o_ref.dtype)

    return kernel


@functools.partial(jax.jit, static_argnames=("epsilon", "block_rows"))
def tanhlu_shifted(x, epsilon: float = 0.01, *, block_rows: int = 4096):
    """Elementwise TanhLU_shifted, matching the PyTorch module exactly."""
    orig_shape = x.shape
    orig_dtype = x.dtype

    eps = float(epsilon)
    inv_eps = 1.0 / eps
    kernel = _make_tanhlu_kernel(eps, inv_eps)

    flat = x.reshape(-1)
    n = flat.shape[0]

    aligned = (n % _LANES) == 0
    if aligned:
        # Fast path: no pad copy, no slice copy -- only the kernel touches HBM.
        rows = n // _LANES
        x2d = flat.reshape(rows, _LANES)
    else:
        # Fallback for unaligned sizes: pad the tail so we can form the 2-D slab.
        rows = pl.cdiv(n, _LANES)
        x2d = jnp.pad(flat, (0, rows * _LANES - n)).reshape(rows, _LANES)

    # Large row tile (~2 MiB f32).  If the whole slab is smaller than one tile,
    # use the full slab (block == array, so the (8,128) rule is satisfied either
    # way: block_rows is a multiple of 8, or the block equals the array extent).
    tile_rows = block_rows if rows > block_rows else rows
    grid = (pl.cdiv(rows, tile_rows),)

    out2d = pl.pallas_call(
        kernel,
        out_shape=jax.ShapeDtypeStruct((rows, _LANES), orig_dtype),
        grid_spec=pl.GridSpec(
            grid=grid,
            in_specs=[pl.BlockSpec((tile_rows, _LANES), lambda i: (i, 0))],
            out_specs=pl.BlockSpec((tile_rows, _LANES), lambda i: (i, 0)),
        ),
        compiler_params=pltpu.CompilerParams(
            dimension_semantics=("parallel",),
        ),
    )(x2d)

    if aligned:
        return out2d.reshape(orig_shape)
    return out2d.reshape(-1)[:n].reshape(orig_shape)


def _reference(x, eps):
    return jnp.where(x >= eps, x, eps * (jnp.tanh((x - eps) / eps) + 1.0))


if __name__ == "__main__":
    key = jax.random.PRNGKey(0)

    # Small NCHW-like input, consistent with typical use on conv/FNN activations.
    x = jax.random.normal(key, (2, 4, 16, 16), dtype=jnp.float32) * 0.1
    eps = 0.01

    y = tanhlu_shifted(x, epsilon=eps)
    y = jax.block_until_ready(y)

    y_ref = _reference(x, eps)
    assert y.shape == x.shape and y.dtype == x.dtype
    assert jnp.max(jnp.abs(y - y_ref)) < 1e-6

    # Exercise the unaligned fallback path too (element count not a multiple of 128).
    x2 = jax.random.normal(jax.random.PRNGKey(1), (3, 5, 7), dtype=jnp.float32) * 0.1
    y2 = jax.block_until_ready(tanhlu_shifted(x2, epsilon=eps))
    assert y2.shape == x2.shape and y2.dtype == x2.dtype
    assert jnp.max(jnp.abs(y2 - _reference(x2, eps))) < 1e-6

    print("KERNEL_OK")
</pallas_src>

<mosaic_0001>
module attributes {stable_mosaic.version = 11 : i64} {
  func.func @kernel(%arg0: i32, %arg1: memref<16x128xf32, #tpu.memory_space<vmem>>, %arg2: memref<16x128xf32, #tpu.memory_space<vmem>>) attributes {dimension_semantics = [#tpu.dimension_semantics<parallel>], iteration_bounds = array<i64: 1>, scalar_prefetch = 0 : i64, scratch_operands = 0 : i64, tpu.core_type = #tpu.core_type<tc>, window_params = [{transform_indices = @transform_0, window_bounds = array<i64: 16, 128>}, {transform_indices = @transform_1, window_bounds = array<i64: 16, 128>}]} {
    %c0 = arith.constant 0 : index
    %c0_0 = arith.constant 0 : index
    %0 = vector.load %arg1[%c0, %c0_0] : memref<16x128xf32, #tpu.memory_space<vmem>>, vector<16x128xf32>
    %cst = arith.constant 0.00999999977 : f32
    %1 = vector.broadcast %cst : f32 to vector<16x128xf32>
    %2 = arith.subf %0, %1 : vector<16x128xf32>
    %cst_1 = arith.constant 1.000000e+02 : f32
    %3 = vector.broadcast %cst_1 : f32 to vector<16x128xf32>
    %4 = arith.mulf %2, %3 : vector<16x128xf32>
    %5 = math.tanh %4 : vector<16x128xf32>
    %cst_2 = arith.constant 0.00999999977 : f32
    %6 = vector.broadcast %cst_2 : f32 to vector<16x128xf32>
    %7 = arith.mulf %6, %5 : vector<16x128xf32>
    %cst_3 = arith.constant 0.00999999977 : f32
    %8 = vector.broadcast %cst_3 : f32 to vector<16x128xf32>
    %9 = arith.addf %7, %8 : vector<16x128xf32>
    %cst_4 = arith.constant 0.00999999977 : f32
    %10 = vector.broadcast %cst_4 : f32 to vector<16x128xf32>
    %11 = arith.cmpf oge, %0, %10 : vector<16x128xf32>
    %12 = arith.select %11, %0, %9 : vector<16x128xi1>, vector<16x128xf32>
    %c0_5 = arith.constant 0 : index
    %c0_6 = arith.constant 0 : index
    %13 = vector.load %arg2[%c0_5, %c0_6] : memref<16x128xf32, #tpu.memory_space<vmem>>, vector<16x128xf32>
    tpu.vector_store %arg2[%c0_5, %c0_6], %12 {strides = array<i32>} : memref<16x128xf32, #tpu.memory_space<vmem>>, vector<16x128xf32>,
    return
  }
  func.func @transform_0(%arg0: i32) -> (i32, i32) {
    %c0_i32 = arith.constant 0 : i32
    %c0_i32_0 = arith.constant 0 : i32
    return %arg0, %c0_i32 : i32, i32
  }
  func.func @transform_1(%arg0: i32) -> (i32, i32) {
    %c0_i32 = arith.constant 0 : i32
    %c0_i32_0 = arith.constant 0 : i32
    return %arg0, %c0_i32 : i32, i32
  }
}

</mosaic_0001>

<llo_original>
// kernel: tanhlu_shifted.1
$region0: #{tanhlu_shifted.1}
  #allocation0 [shape = 'u32[]', space=smem, size = 0x4, offset = 0x4, fixed_abs, tag = 'smem constant byte address 0x4 - core index']
  #allocation1 [shape = 'u32[144,128]{1,0:T(1,128)}', space=vmem, size = 0x12000, scoped, tag = 'internal scratch']
  %s0 = inlined_call_operand.vmem [shape: f32[16,128], index: 0, kind: input, shape index: {}]
  %s1 = inlined_call_operand.vmem [shape: f32[16,128], index: 1, kind: output, shape index: {}]
  %s2 = sld [smem:[#allocation0]]
  $region14: #{tanhlu_shifted.1} parent=0
    _
  %s4 = ssub.s32 1, %s2
  %s5 = scalar_select 0, %s4, %s2
  // Predicated region
  $region2: #{tanhlu_shifted.1} parent=0 // pred_check
    _
  $region3: #{tanhlu_shifted.1} parent=0 // pred_check_branch
    %7 = sbr.rel (0) target = $region5
  $region4: #{tanhlu_shifted.1} parent=0 // pred_region
    _
  $region5: #{tanhlu_shifted.1} parent=0 // pred_fallthru
    _
  %v8 = vld [vmem:[%s0] sm:$0xff]
  %v9 = vld [vmem:[%s0 + $0x8] sm:$0xff]
  %v10 = vsub.f32 %v8, 0.01
  %v11 = vsub.f32 %v9, 0.01
  %v12 = vmul.f32 %v10, 100.0
  %v13 = vmul.f32 %v11, 100.0
  %v14 = vtanh.pop %v12
  %v15 = vtanh.pop %v13
  %v16 = vmul.f32 %v14, 0.01
  %v17 = vmul.f32 %v15, 0.01
  %v18 = vadd.f32 %v16, 0.01
  %v19 = vadd.f32 %v17, 0.01
  %vm20 = vcmp.ge.f32.partialorder %v8, 0.01
  %vm21 = vcmp.ge.f32.partialorder %v9, 0.01
  %v22 = vsel %vm20, %v8, %v18
  %v23 = vsel %vm21, %v9, %v19
  %24 = vst [vmem:[%s1] sm:$0xff] %v22
  %25 = vst [vmem:[%s1 + $0x8] sm:$0xff] %v23
  // Predicated region
  $region6: #{tanhlu_shifted.1} parent=0 // pred_check
    _
  $region7: #{tanhlu_shifted.1} parent=0 // pred_check_branch
    %27 = sbr.rel (0) target = $region9
  $region8: #{tanhlu_shifted.1} parent=0 // pred_region
    _
  $region9: #{tanhlu_shifted.1} parent=0 // pred_fallthru
    _
  // Predicated region
  $region10: #{tanhlu_shifted.1} parent=0 // pred_check
    _
  $region11: #{tanhlu_shifted.1} parent=0 // pred_check_branch
    %29 = sbr.rel (0) target = $region13
  $region12: #{tanhlu_shifted.1} parent=0 // pred_region
    _
  $region13: #{tanhlu_shifted.1} parent=0 // pred_fallthru
    _

</llo_original>
